<compile_context>
chip_gen: v5e
topology: v5e:2x2
jax: 0.10.0
libtpu: 0.0.40
codegen_flags: <defaults>
</compile_context>

<pallas_src>
import jax
import jax.numpy as jnp
from jax.experimental import pallas as pl
from jax.experimental.pallas import tpu as pltpu

WINDOW_SIZE = 11
SIGMA = 3.0
C1 = 0.01 ** 2
C2 = 0.03 ** 2


def gaussian_1d(width: int, sigma: float) -> jnp.ndarray:
    x = jnp.arange(width, dtype=jnp.float32)
    g = jnp.exp(-((x - width // 2) ** 2) / (2.0 * sigma ** 2))
    return g / jnp.sum(g)


def band_matrix(n: int, g: jnp.ndarray) -> jnp.ndarray:
    """M such that (M @ x) == zero-padded 1-D cross-correlation of x with g.

    g is a symmetric Gaussian, hence M is symmetric: the same matrix applies
    on the right-hand side (x @ M) for the lane-direction blur — no transpose.
    """
    w = g.shape[0]
    half = w // 2
    idx = jnp.arange(n)
    diff = idx[None, :] - idx[:, None] + half          # M[i, m] uses g[m - i + half]
    valid = (diff >= 0) & (diff < w)
    return jnp.where(valid, g[jnp.clip(diff, 0, w - 1)], 0.0).astype(jnp.float32)


def _device_kind() -> str:
    try:
        return jax.devices()[0].device_kind.lower()
    except Exception:  # pragma: no cover - CPU fallback / odd runtimes
        return ""


def _mxu_lane_target(kind: str) -> int:
    """MXU tile width: 128 on v2-v5 (128x128 MXU), 256 on v6e/v7x (256x256)."""
    for v in ("v2", "v3", "v4", "v5"):
        if v in kind:
            return 128
    return 256


def _choose_pack(n_planes: int, w: int, target_lanes: int) -> int:
    """Smallest divisor P of n_planes with P*w >= target_lanes (MXU-matched
    lane-dense packing); falls back to the largest divisor if none reaches it."""
    divisors = [p for p in range(1, n_planes + 1) if n_planes % p == 0]
    for p in divisors:
        if p * w >= target_lanes:
            return p
    return divisors[-1]


def _vmem_limit_bytes(h: int, pw: int, single_buffer_consts: bool, kind: str) -> int:
    plane = h * pw * 4
    const_bufs = 1 if single_buffer_consts else 2
    need = (
        2 * 2 * plane                              # x1, x2 input blocks, double-buffered
        + const_bufs * (h * h + pw * pw) * 4       # gh + gw band matrices
        + 2 * pw * 4                               # (1, PW) output block, double-buffered
        + 22 * plane                               # in-kernel f32 temporaries (u, v, epilogue)
    )
    cap = (56 << 20) if "v7" in kind else (100 << 20)
    return int(min(cap, max(32 << 20, need * 5 // 4)))


def _ssim_kernel(x1_ref, x2_ref, gh_ref, gw_ref, out_ref):
    x1 = x1_ref[0]           # (H, PW) float32, lane-dense packed planes
    x2 = x2_ref[0]
    gh = gh_ref[...]         # (H, H)    symmetric band matrix
    gw = gw_ref[...]         # (PW, PW)  block-diagonal symmetric band matrix
    pw = x1.shape[1]

    # Fused sublane-direction (Gh) blur: one (H,H) @ (H,5*PW) MXU pass for all
    # five maps (matmul distributes over the lane concatenation).
    u = jnp.concatenate([x1, x2, x1 * x2, x1 * x1, x2 * x2], axis=1)     # (H, 5*PW)
    v = jnp.dot(gh, u, preferred_element_type=jnp.float32)               # (H, 5*PW)

    # Lane-direction (Gw) blur per PW slice; gw is symmetric -> no transpose.
    # Slices start at multiples of PW (a multiple of 128) -> clean tiles.
    def gw_blur(sl):
        return jnp.dot(v[:, sl * pw:(sl + 1) * pw], gw,
                       preferred_element_type=jnp.float32)

    mu1 = gw_blur(0)
    mu2 = gw_blur(1)

    # Build `num` first so its temporaries can die before `den` is built.
    mu1_mu2 = mu1 * mu2
    sigma12 = gw_blur(2) - mu1_mu2
    num = (2.0 * mu1_mu2 + C1) * (2.0 * sigma12 + C2)

    mu1_sq = mu1 * mu1
    mu2_sq = mu2 * mu2
    sigma1_sq = gw_blur(3) - mu1_sq
    sigma2_sq = gw_blur(4) - mu2_sq
    den = (mu1_sq + mu2_sq + C1) * (sigma1_sq + sigma2_sq + C2)

    # Lane-dense per-step partial sum (sublane reduce only); the final tiny
    # reduction happens in the wrapper, so the grid carries no dependency.
    out_ref[0] = jnp.sum(num / den, axis=0, keepdims=True)


def ssim(img1: jnp.ndarray, img2: jnp.ndarray) -> jnp.ndarray:
    """img1, img2: (B, C, H, W). Returns scalar mean SSIM (size_average=True)."""
    B, C, H, W = img1.shape
    N = B * C

    kind = _device_kind()
    P = _choose_pack(N, W, _mxu_lane_target(kind))
    G = N // P
    PW = P * W

    g = gaussian_1d(WINDOW_SIZE, SIGMA)
    gh = band_matrix(H, g)                                           # (H, H)
    if P == 1:
        gw_blk = band_matrix(W, g)                                   # (W, W)
    else:
        gw_blk = jnp.kron(jnp.eye(P, dtype=jnp.float32),
                          band_matrix(W, g)).astype(jnp.float32)     # (PW, PW)

    def pack(x):
        x = x.reshape(N, H, W).astype(jnp.float32)
        if P == 1:
            return x                       # pure reshape; no extra HBM round trip
        x = x.reshape(G, P, H, W)
        return jnp.transpose(x, (0, 2, 1, 3)).reshape(G, H, PW)

    x1 = pack(img1)
    x2 = pack(img2)

    plane_spec = pl.BlockSpec((1, H, PW), lambda i: (i, 0, 0))

    # Advisory cost: one (H,H)@(H,5PW) dot + five (H,PW)@(PW,PW) dots + epilogue.
    flops = G * (2 * H * H * 5 * PW + 5 * 2 * H * PW * PW + 20 * H * PW)
    bytes_accessed = G * (2 * H * PW + PW) * 4 + (H * H + PW * PW) * 4

    def run(single_buffer_consts: bool):
        if single_buffer_consts:
            gh_spec = pl.BlockSpec((H, H), lambda i: (0, 0),
                                   pipeline_mode=pl.Buffered(1))
            gw_spec = pl.BlockSpec((PW, PW), lambda i: (0, 0),
                                   pipeline_mode=pl.Buffered(1))
        else:
            gh_spec = pl.BlockSpec((H, H), lambda i: (0, 0))
            gw_spec = pl.BlockSpec((PW, PW), lambda i: (0, 0))

        return pl.pallas_call(
            _ssim_kernel,
            out_shape=jax.ShapeDtypeStruct((G, 1, PW), jnp.float32),
            grid_spec=pltpu.PrefetchScalarGridSpec(
                num_scalar_prefetch=0,
                grid=(G,),
                in_specs=[plane_spec, plane_spec, gh_spec, gw_spec],
                out_specs=pl.BlockSpec((1, 1, PW), lambda i: (i, 0, 0)),
            ),
            compiler_params=pltpu.CompilerParams(
                dimension_semantics=("parallel",),
                vmem_limit_bytes=_vmem_limit_bytes(H, PW, single_buffer_consts, kind),
            ),
            cost_estimate=pl.CostEstimate(
                flops=flops, transcendentals=0, bytes_accessed=bytes_accessed),
        )(x1, x2, gh, gw_blk)

    try:
        # Single-buffered constant operands (gh/gw never change across steps).
        partial = jax.block_until_ready(run(True))
    except Exception:
        # Fallback for JAX/Mosaic versions that reject pl.Buffered(1).
        partial = run(False)

    return (jnp.sum(partial) / (N * H * W)).astype(jnp.float32)


def _ssim_reference(img1, img2):
    """Pure-JAX reference using an explicit depthwise conv2d (for validation)."""
    B, C, H, W = img1.shape
    g = gaussian_1d(WINDOW_SIZE, SIGMA)
    w2d = jnp.outer(g, g)                                   # (11, 11)
    win = jnp.broadcast_to(w2d, (C, 1, WINDOW_SIZE, WINDOW_SIZE))

    def conv(x):
        return jax.lax.conv_general_dilated(
            x, win,
            window_strides=(1, 1),
            padding=[(WINDOW_SIZE // 2, WINDOW_SIZE // 2)] * 2,
            dimension_numbers=("NCHW", "OIHW", "NCHW"),
            feature_group_count=C)

    mu1 = conv(img1)
    mu2 = conv(img2)
    mu1_sq, mu2_sq, mu1_mu2 = mu1 * mu1, mu2 * mu2, mu1 * mu2
    s1 = conv(img1 * img1) - mu1_sq
    s2 = conv(img2 * img2) - mu2_sq
    s12 = conv(img1 * img2) - mu1_mu2
    ssim_map = ((2 * mu1_mu2 + C1) * (2 * s12 + C2)) / (
        (mu1_sq + mu2_sq + C1) * (s1 + s2 + C2))
    return jnp.mean(ssim_map)


if __name__ == "__main__":
    key = jax.random.PRNGKey(0)
    k1, k2 = jax.random.split(key)
    B, C, H, W = 2, 4, 16, 16
    img1 = jax.random.uniform(k1, (B, C, H, W), dtype=jnp.float32)
    img2 = jax.random.uniform(k2, (B, C, H, W), dtype=jnp.float32)

    out = ssim(img1, img2)
    out = jax.block_until_ready(out)

    ref = jax.block_until_ready(_ssim_reference(img1, img2))
    assert jnp.allclose(out, ref, atol=1e-5, rtol=1e-5), (out, ref)

    print("KERNEL_OK")
</pallas_src>

<mosaic_0001>
module attributes {stable_mosaic.version = 11 : i64} {
  func.func @_ssim_kernel(%arg0: i32, %arg1: memref<1x16x128xf32, #tpu.memory_space<vmem>>, %arg2: memref<1x16x128xf32, #tpu.memory_space<vmem>>, %arg3: memref<16x16xf32, #tpu.memory_space<vmem>>, %arg4: memref<128x128xf32, #tpu.memory_space<vmem>>, %arg5: memref<1x1x128xf32, #tpu.memory_space<vmem>>) attributes {dimension_semantics = [#tpu.dimension_semantics<parallel>], iteration_bounds = array<i64: 1>, scalar_prefetch = 0 : i64, scratch_operands = 0 : i64, tpu.core_type = #tpu.core_type<tc>, window_params = [{transform_indices = @transform_0, window_bounds = array<i64: 1, 16, 128>}, {transform_indices = @transform_1, window_bounds = array<i64: 1, 16, 128>}, {pipeline_mode = #tpu.pipeline_mode<synchronous>, transform_indices = @transform_2, window_bounds = array<i64: 16, 16>}, {pipeline_mode = #tpu.pipeline_mode<synchronous>, transform_indices = @transform_3, window_bounds = array<i64: 128, 128>}, {transform_indices = @transform_4, window_bounds = array<i64: 1, 1, 128>}]} {
    %c0 = arith.constant 0 : index
    %c0_0 = arith.constant 0 : index
    %c0_1 = arith.constant 0 : index
    %0 = vector.load %arg1[%c0, %c0_0, %c0_1] : memref<1x16x128xf32, #tpu.memory_space<vmem>>, vector<1x16x128xf32>
    %1 = vector.shape_cast %0 : vector<1x16x128xf32> to vector<16x128xf32>
    %c0_2 = arith.constant 0 : index
    %c0_3 = arith.constant 0 : index
    %c0_4 = arith.constant 0 : index
    %2 = vector.load %arg2[%c0_2, %c0_3, %c0_4] : memref<1x16x128xf32, #tpu.memory_space<vmem>>, vector<1x16x128xf32>
    %3 = vector.shape_cast %2 : vector<1x16x128xf32> to vector<16x128xf32>
    %c0_5 = arith.constant 0 : index
    %c0_6 = arith.constant 0 : index
    %4 = vector.load %arg3[%c0_5, %c0_6] : memref<16x16xf32, #tpu.memory_space<vmem>>, vector<16x16xf32>
    %c0_7 = arith.constant 0 : index
    %c0_8 = arith.constant 0 : index
    %5 = vector.load %arg4[%c0_7, %c0_8] : memref<128x128xf32, #tpu.memory_space<vmem>>, vector<128x128xf32>
    %6 = arith.mulf %1, %3 : vector<16x128xf32>
    %7 = arith.mulf %1, %1 : vector<16x128xf32>
    %8 = arith.mulf %3, %3 : vector<16x128xf32>
    %9 = tpu.concatenate %1, %3, %6, %7, %8 in 1 : vector<16x128xf32>, vector<16x128xf32>, vector<16x128xf32>, vector<16x128xf32>, vector<16x128xf32> -> vector<16x640xf32>
    %cst = arith.constant dense<0.000000e+00> : vector<16x640xf32>
    %10 = tpu.matmul %4, %9, %cst {dimension_numbers = #tpu.dot_dimension_numbers<[1], [0], [0], [1], [0, 0, 1, 1], [], []>} : vector<16x16xf32>, vector<16x640xf32>, vector<16x640xf32> -> vector<16x640xf32>
    %11 = vector.extract_strided_slice %10 {offsets = [0, 0], sizes = [16, 128], strides = [1, 1]} : vector<16x640xf32> to vector<16x128xf32>
    %cst_9 = arith.constant dense<0.000000e+00> : vector<16x128xf32>
    %12 = tpu.matmul %11, %5, %cst_9 {dimension_numbers = #tpu.dot_dimension_numbers<[1], [0], [0], [1], [0, 0, 1, 1], [], []>} : vector<16x128xf32>, vector<128x128xf32>, vector<16x128xf32> -> vector<16x128xf32>
    %13 = vector.extract_strided_slice %10 {offsets = [0, 128], sizes = [16, 128], strides = [1, 1]} : vector<16x640xf32> to vector<16x128xf32>
    %cst_10 = arith.constant dense<0.000000e+00> : vector<16x128xf32>
    %14 = tpu.matmul %13, %5, %cst_10 {dimension_numbers = #tpu.dot_dimension_numbers<[1], [0], [0], [1], [0, 0, 1, 1], [], []>} : vector<16x128xf32>, vector<128x128xf32>, vector<16x128xf32> -> vector<16x128xf32>
    %15 = arith.mulf %12, %14 : vector<16x128xf32>
    %16 = vector.extract_strided_slice %10 {offsets = [0, 256], sizes = [16, 128], strides = [1, 1]} : vector<16x640xf32> to vector<16x128xf32>
    %cst_11 = arith.constant dense<0.000000e+00> : vector<16x128xf32>
    %17 = tpu.matmul %16, %5, %cst_11 {dimension_numbers = #tpu.dot_dimension_numbers<[1], [0], [0], [1], [0, 0, 1, 1], [], []>} : vector<16x128xf32>, vector<128x128xf32>, vector<16x128xf32> -> vector<16x128xf32>
    %18 = arith.subf %17, %15 : vector<16x128xf32>
    %cst_12 = arith.constant 2.000000e+00 : f32
    %19 = vector.broadcast %cst_12 : f32 to vector<16x128xf32>
    %20 = arith.mulf %19, %15 : vector<16x128xf32>
    %cst_13 = arith.constant 9.99999974E-5 : f32
    %21 = vector.broadcast %cst_13 : f32 to vector<16x128xf32>
    %22 = arith.addf %20, %21 : vector<16x128xf32>
    %cst_14 = arith.constant 2.000000e+00 : f32
    %23 = vector.broadcast %cst_14 : f32 to vector<16x128xf32>
    %24 = arith.mulf %23, %18 : vector<16x128xf32>
    %cst_15 = arith.constant 8.99999984E-4 : f32
    %25 = vector.broadcast %cst_15 : f32 to vector<16x128xf32>
    %26 = arith.addf %24, %25 : vector<16x128xf32>
    %27 = arith.mulf %22, %26 : vector<16x128xf32>
    %28 = arith.mulf %12, %12 : vector<16x128xf32>
    %29 = arith.mulf %14, %14 : vector<16x128xf32>
    %30 = vector.extract_strided_slice %10 {offsets = [0, 384], sizes = [16, 128], strides = [1, 1]} : vector<16x640xf32> to vector<16x128xf32>
    %cst_16 = arith.constant dense<0.000000e+00> : vector<16x128xf32>
    %31 = tpu.matmul %30, %5, %cst_16 {dimension_numbers = #tpu.dot_dimension_numbers<[1], [0], [0], [1], [0, 0, 1, 1], [], []>} : vector<16x128xf32>, vector<128x128xf32>, vector<16x128xf32> -> vector<16x128xf32>
    %32 = arith.subf %31, %28 : vector<16x128xf32>
    %33 = vector.extract_strided_slice %10 {offsets = [0, 512], sizes = [16, 128], strides = [1, 1]} : vector<16x640xf32> to vector<16x128xf32>
    %cst_17 = arith.constant dense<0.000000e+00> : vector<16x128xf32>
    %34 = tpu.matmul %33, %5, %cst_17 {dimension_numbers = #tpu.dot_dimension_numbers<[1], [0], [0], [1], [0, 0, 1, 1], [], []>} : vector<16x128xf32>, vector<128x128xf32>, vector<16x128xf32> -> vector<16x128xf32>
    %35 = arith.subf %34, %29 : vector<16x128xf32>
    %36 = arith.addf %28, %29 : vector<16x128xf32>
    %cst_18 = arith.constant 9.99999974E-5 : f32
    %37 = vector.broadcast %cst_18 : f32 to vector<16x128xf32>
    %38 = arith.addf %36, %37 : vector<16x128xf32>
    %39 = arith.addf %32, %35 : vector<16x128xf32>
    %cst_19 = arith.constant 8.99999984E-4 : f32
    %40 = vector.broadcast %cst_19 : f32 to vector<16x128xf32>
    %41 = arith.addf %39, %40 : vector<16x128xf32>
    %42 = arith.mulf %38, %41 : vector<16x128xf32>
    %43 = arith.divf %27, %42 : vector<16x128xf32>
    %cst_20 = arith.constant dense<0.000000e+00> : vector<128xf32>
    %44 = vector.multi_reduction <add>, %43, %cst_20 [0] : vector<16x128xf32> to vector<128xf32>
    %45 = vector.shape_cast %44 : vector<128xf32> to vector<1x128xf32>
    %c0_21 = arith.constant 0 : index
    %c0_22 = arith.constant 0 : index
    %c0_23 = arith.constant 0 : index
    %46 = vector.load %arg5[%c0_21, %c0_22, %c0_23] : memref<1x1x128xf32, #tpu.memory_space<vmem>>, vector<1x1x128xf32>
    %47 = vector.shape_cast %46 : vector<1x1x128xf32> to vector<1x128xf32>
    %48 = vector.shape_cast %45 : vector<1x128xf32> to vector<1x1x128xf32>
    tpu.vector_store %arg5[%c0_21, %c0_22, %c0_23], %48 {strides = array<i32>} : memref<1x1x128xf32, #tpu.memory_space<vmem>>, vector<1x1x128xf32>,
    return
  }
  func.func @transform_0(%arg0: i32) -> (i32, i32, i32) {
    %c0_i32 = arith.constant 0 : i32
    %c0_i32_0 = arith.constant 0 : i32
    %c0_i32_1 = arith.constant 0 : i32
    return %arg0, %c0_i32, %c0_i32_0 : i32, i32, i32
  }
  func.func @transform_1(%arg0: i32) -> (i32, i32, i32) {
    %c0_i32 = arith.constant 0 : i32
    %c0_i32_0 = arith.constant 0 : i32
    %c0_i32_1 = arith.constant 0 : i32
    return %arg0, %c0_i32, %c0_i32_0 : i32, i32, i32
  }
  func.func @transform_2(%arg0: i32) -> (i32, i32) {
    %c0_i32 = arith.constant 0 : i32
    %c0_i32_0 = arith.constant 0 : i32
    %c0_i32_1 = arith.constant 0 : i32
    return %c0_i32, %c0_i32_0 : i32, i32
  }
  func.func @transform_3(%arg0: i32) -> (i32, i32) {
    %c0_i32 = arith.constant 0 : i32
    %c0_i32_0 = arith.constant 0 : i32
    %c0_i32_1 = arith.constant 0 : i32
    return %c0_i32, %c0_i32_0 : i32, i32
  }
  func.func @transform_4(%arg0: i32) -> (i32, i32, i32) {
    %c0_i32 = arith.constant 0 : i32
    %c0_i32_0 = arith.constant 0 : i32
    %c0_i32_1 = arith.constant 0 : i32
    return %arg0, %c0_i32, %c0_i32_0 : i32, i32, i32
  }
}

module attributes {stable_mosaic.version = 11 : i64} {
  func.func @_ssim_kernel(%arg0: i32, %arg1: memref<1x16x128xf32, #tpu.memory_space<vmem>>, %arg2: memref<1x16x128xf32, #tpu.memory_space<vmem>>, %arg3: memref<16x16xf32, #tpu.memory_space<vmem>>, %arg4: memref<128x128xf32, #tpu.memory_space<vmem>>, %arg5: memref<1x1x128xf32, #tpu.memory_space<vmem>>) attributes {dimension_semantics = [#tpu.dimension_semantics<parallel>], iteration_bounds = array<i64: 1>, scalar_prefetch = 0 : i64, scratch_operands = 0 : i64, tpu.core_type = #tpu.core_type<tc>, window_params = [{transform_indices = @transform_0, window_bounds = array<i64: 1, 16, 128>}, {transform_indices = @transform_1, window_bounds = array<i64: 1, 16, 128>}, {pipeline_mode = #tpu.pipeline_mode<synchronous>, transform_indices = @transform_2, window_bounds = array<i64: 16, 16>}, {pipeline_mode = #tpu.pipeline_mode<synchronous>, transform_indices = @transform_3, window_bounds = array<i64: 128, 128>}, {transform_indices = @transform_4, window_bounds = array<i64: 1, 1, 128>}]} {
    %c0 = arith.constant 0 : index
    %c0_0 = arith.constant 0 : index
    %c0_1 = arith.constant 0 : index
    %0 = vector.load %arg1[%c0, %c0_0, %c0_1] : memref<1x16x128xf32, #tpu.memory_space<vmem>>, vector<1x16x128xf32>
    %1 = vector.shape_cast %0 : vector<1x16x128xf32> to vector<16x128xf32>
    %c0_2 = arith.constant 0 : index
    %c0_3 = arith.constant 0 : index
    %c0_4 = arith.constant 0 : index
    %2 = vector.load %arg2[%c0_2, %c0_3, %c0_4] : memref<1x16x128xf32, #tpu.memory_space<vmem>>, vector<1x16x128xf32>
    %3 = vector.shape_cast %2 : vector<1x16x128xf32> to vector<16x128xf32>
    %c0_5 = arith.constant 0 : index
    %c0_6 = arith.constant 0 : index
    %4 = vector.load %arg3[%c0_5, %c0_6] : memref<16x16xf32, #tpu.memory_space<vmem>>, vector<16x16xf32>
    %c0_7 = arith.constant 0 : index
    %c0_8 = arith.constant 0 : index
    %5 = vector.load %arg4[%c0_7, %c0_8] : memref<128x128xf32, #tpu.memory_space<vmem>>, vector<128x128xf32>
    %6 = arith.mulf %1, %3 : vector<16x128xf32>
    %7 = arith.mulf %1, %1 : vector<16x128xf32>
    %8 = arith.mulf %3, %3 : vector<16x128xf32>
    %9 = tpu.concatenate %1, %3, %6, %7, %8 in 1 : vector<16x128xf32>, vector<16x128xf32>, vector<16x128xf32>, vector<16x128xf32>, vector<16x128xf32> -> vector<16x640xf32>
    %cst = arith.constant dense<0.000000e+00> : vector<16x640xf32>
    %10 = tpu.matmul %4, %9, %cst {dimension_numbers = #tpu.dot_dimension_numbers<[1], [0], [0], [1], [0, 0, 1, 1], [], []>} : vector<16x16xf32>, vector<16x640xf32>, vector<16x640xf32> -> vector<16x640xf32>
    %11 = vector.extract_strided_slice %10 {offsets = [0, 0], sizes = [16, 128], strides = [1, 1]} : vector<16x640xf32> to vector<16x128xf32>
    %cst_9 = arith.constant dense<0.000000e+00> : vector<16x128xf32>
    %12 = tpu.matmul %11, %5, %cst_9 {dimension_numbers = #tpu.dot_dimension_numbers<[1], [0], [0], [1], [0, 0, 1, 1], [], []>} : vector<16x128xf32>, vector<128x128xf32>, vector<16x128xf32> -> vector<16x128xf32>
    %13 = vector.extract_strided_slice %10 {offsets = [0, 128], sizes = [16, 128], strides = [1, 1]} : vector<16x640xf32> to vector<16x128xf32>
    %cst_10 = arith.constant dense<0.000000e+00> : vector<16x128xf32>
    %14 = tpu.matmul %13, %5, %cst_10 {dimension_numbers = #tpu.dot_dimension_numbers<[1], [0], [0], [1], [0, 0, 1, 1], [], []>} : vector<16x128xf32>, vector<128x128xf32>, vector<16x128xf32> -> vector<16x128xf32>
    %15 = arith.mulf %12, %14 : vector<16x128xf32>
    %16 = vector.extract_strided_slice %10 {offsets = [0, 256], sizes = [16, 128], strides = [1, 1]} : vector<16x640xf32> to vector<16x128xf32>
    %cst_11 = arith.constant dense<0.000000e+00> : vector<16x128xf32>
    %17 = tpu.matmul %16, %5, %cst_11 {dimension_numbers = #tpu.dot_dimension_numbers<[1], [0], [0], [1], [0, 0, 1, 1], [], []>} : vector<16x128xf32>, vector<128x128xf32>, vector<16x128xf32> -> vector<16x128xf32>
    %18 = arith.subf %17, %15 : vector<16x128xf32>
    %cst_12 = arith.constant 2.000000e+00 : f32
    %19 = vector.broadcast %cst_12 : f32 to vector<16x128xf32>
    %20 = arith.mulf %19, %15 : vector<16x128xf32>
    %cst_13 = arith.constant 9.99999974E-5 : f32
    %21 = vector.broadcast %cst_13 : f32 to vector<16x128xf32>
    %22 = arith.addf %20, %21 : vector<16x128xf32>
    %cst_14 = arith.constant 2.000000e+00 : f32
    %23 = vector.broadcast %cst_14 : f32 to vector<16x128xf32>
    %24 = arith.mulf %23, %18 : vector<16x128xf32>
    %cst_15 = arith.constant 8.99999984E-4 : f32
    %25 = vector.broadcast %cst_15 : f32 to vector<16x128xf32>
    %26 = arith.addf %24, %25 : vector<16x128xf32>
    %27 = arith.mulf %22, %26 : vector<16x128xf32>
    %28 = arith.mulf %12, %12 : vector<16x128xf32>
    %29 = arith.mulf %14, %14 : vector<16x128xf32>
    %30 = vector.extract_strided_slice %10 {offsets = [0, 384], sizes = [16, 128], strides = [1, 1]} : vector<16x640xf32> to vector<16x128xf32>
    %cst_16 = arith.constant dense<0.000000e+00> : vector<16x128xf32>
    %31 = tpu.matmul %30, %5, %cst_16 {dimension_numbers = #tpu.dot_dimension_numbers<[1], [0], [0], [1], [0, 0, 1, 1], [], []>} : vector<16x128xf32>, vector<128x128xf32>, vector<16x128xf32> -> vector<16x128xf32>
    %32 = arith.subf %31, %28 : vector<16x128xf32>
    %33 = vector.extract_strided_slice %10 {offsets = [0, 512], sizes = [16, 128], strides = [1, 1]} : vector<16x640xf32> to vector<16x128xf32>
    %cst_17 = arith.constant dense<0.000000e+00> : vector<16x128xf32>
    %34 = tpu.matmul %33, %5, %cst_17 {dimension_numbers = #tpu.dot_dimension_numbers<[1], [0], [0], [1], [0, 0, 1, 1], [], []>} : vector<16x128xf32>, vector<128x128xf32>, vector<16x128xf32> -> vector<16x128xf32>
    %35 = arith.subf %34, %29 : vector<16x128xf32>
    %36 = arith.addf %28, %29 : vector<16x128xf32>
    %cst_18 = arith.constant 9.99999974E-5 : f32
    %37 = vector.broadcast %cst_18 : f32 to vector<16x128xf32>
    %38 = arith.addf %36, %37 : vector<16x128xf32>
    %39 = arith.addf %32, %35 : vector<16x128xf32>
    %cst_19 = arith.constant 8.99999984E-4 : f32
    %40 = vector.broadcast %cst_19 : f32 to vector<16x128xf32>
    %41 = arith.addf %39, %40 : vector<16x128xf32>
    %42 = arith.mulf %38, %41 : vector<16x128xf32>
    %43 = arith.divf %27, %42 : vector<16x128xf32>
    %cst_20 = arith.constant dense<0.000000e+00> : vector<128xf32>
    %44 = vector.multi_reduction <add>, %43, %cst_20 [0] : vector<16x128xf32> to vector<128xf32>
    %45 = vector.shape_cast %44 : vector<128xf32> to vector<1x128xf32>
    %c0_21 = arith.constant 0 : index
    %c0_22 = arith.constant 0 : index
    %c0_23 = arith.constant 0 : index
    %46 = vector.load %arg5[%c0_21, %c0_22, %c0_23] : memref<1x1x128xf32, #tpu.memory_space<vmem>>, vector<1x1x128xf32>
    %47 = vector.shape_cast %46 : vector<1x1x128xf32> to vector<1x128xf32>
    %48 = vector.shape_cast %45 : vector<1x128xf32> to vector<1x1x128xf32>
    tpu.vector_store %arg5[%c0_21, %c0_22, %c0_23], %48 {strides = array<i32>} : memref<1x1x128xf32, #tpu.memory_space<vmem>>, vector<1x1x128xf32>,
    return
  }
  func.func @transform_0(%arg0: i32) -> (i32, i32, i32) {
    %c0_i32 = arith.constant 0 : i32
    %c0_i32_0 = arith.constant 0 : i32
    %c0_i32_1 = arith.constant 0 : i32
    return %arg0, %c0_i32, %c0_i32_0 : i32, i32, i32
  }
  func.func @transform_1(%arg0: i32) -> (i32, i32, i32) {
    %c0_i32 = arith.constant 0 : i32
    %c0_i32_0 = arith.constant 0 : i32
    %c0_i32_1 = arith.constant 0 : i32
    return %arg0, %c0_i32, %c0_i32_0 : i32, i32, i32
  }
  func.func @transform_2(%arg0: i32) -> (i32, i32) {
    %c0_i32 = arith.constant 0 : i32
    %c0_i32_0 = arith.constant 0 : i32
    %c0_i32_1 = arith.constant 0 : i32
    return %c0_i32, %c0_i32_0 : i32, i32
  }
  func.func @transform_3(%arg0: i32) -> (i32, i32) {
    %c0_i32 = arith.constant 0 : i32
    %c0_i32_0 = arith.constant 0 : i32
    %c0_i32_1 = arith.constant 0 : i32
    return %c0_i32, %c0_i32_0 : i32, i32
  }
  func.func @transform_4(%arg0: i32) -> (i32, i32, i32) {
    %c0_i32 = arith.constant 0 : i32
    %c0_i32_0 = arith.constant 0 : i32
    %c0_i32_1 = arith.constant 0 : i32
    return %arg0, %c0_i32, %c0_i32_0 : i32, i32, i32
  }
}

</mosaic_0001>

<llo_original>
// kernel: tpu_custom_call.1
$region0: #{tpu_custom_call.1}
  #allocation0 [shape = 'u32[]', space=smem, size = 0x4, offset = 0x4, fixed_abs, tag = 'smem constant byte address 0x4 - core index']
  #allocation1 [shape = 'u32[72,128]{1,0:T(1,128)}', space=vmem, size = 0x9000, scoped, tag = 'internal scratch']
  %s0 = inlined_call_operand.hbm [shape: f32[1,16,128], index: 0, kind: input, shape index: {}]
  %s1 = inlined_call_operand.hbm [shape: f32[1,16,128], index: 1, kind: input, shape index: {}]
  %s2 = inlined_call_operand.hbm [shape: f32[16,16], index: 2, kind: input, shape index: {}]
  %s3 = inlined_call_operand.hbm [shape: f32[128,128], index: 3, kind: input, shape index: {}]
  %s4 = inlined_call_operand.hbm [shape: f32[1,1,128], index: 4, kind: output, shape index: {}]
  %s5 = sld [smem:[#allocation0]]
  $region42: #{tpu_custom_call.1} parent=0
    _
  %s7 = ssub.s32 1, %s5
  %s8 = scalar_select 0, %s7, %s5
  $region1: #{tpu_custom_call.1} parent=0
    #allocation2 [shape = 'u8[8192]{0}', space=vmem, size = 0x2000, scoped, tag = 'input window, operand 0, single buffered']
    #allocation3 [shape = 's32[1]{0}', space=sflag, size = 0x4, scoped, tag = 'scoped memory for tpu_custom_call.1']
    #allocation4 [shape = 's32[1]{0}', space=sflag, size = 0x4, scoped, tag = 'scoped memory for tpu_custom_call.1']
    #allocation5 [shape = 'u8[8192]{0}', space=vmem, size = 0x2000, scoped, tag = 'input window, operand 1, single buffered']
    #allocation6 [shape = 's32[1]{0}', space=sflag, size = 0x4, scoped, tag = 'scoped memory for tpu_custom_call.1']
    #allocation7 [shape = 'u8[8192]{0}', space=vmem, size = 0x2000, scoped, tag = 'input window, operand 2, single buffered']
    #allocation8 [shape = 'u8[65536]{0}', space=vmem, size = 0x10000, scoped, tag = 'input window, operand 3, single buffered']
    #allocation9 [shape = 's32[1]{0}', space=sflag, size = 0x4, scoped, tag = 'scoped memory for tpu_custom_call.1']
    #allocation10 [shape = 'u8[512]{0}', space=vmem, size = 0x400, scoped, tag = 'output window, operand 0, single buffered']
    %9 = vsyncpa [#allocation3], 0
    %10 = vsyncpa [#allocation6], 0
    %11 = vsyncpa [#allocation9], 0
    %12 = vsyncpa [#allocation4], 0
    // Predicated region
    $region2: #{tpu_custom_call.1} parent=1 // pred_check
      _
    $region3: #{tpu_custom_call.1} parent=1 // pred_check_branch
      %14 = sbr.rel (0) target = $region5
    $region4: #{tpu_custom_call.1} parent=1 // pred_region
      %16 = vsyncadd [#allocation3], 0
      %s17 = sshll.u32 %s0, 4
      %s18 = int_to_ptr.hbm [resolvable:$true] %s17
      %s19 = sshll.u32 [#allocation2], 4
      %s20 = int_to_ptr.vmem [resolvable:$true] %s19
      %25 = dma.hbm_to_vmem [thread:$0]  %s18, 256, %s20, [#allocation3], 128, 128, 8
    $region5: #{tpu_custom_call.1} parent=1 // pred_fallthru
      _
    // Predicated region
    $region6: #{tpu_custom_call.1} parent=1 // pred_check
      _
    $region7: #{tpu_custom_call.1} parent=1 // pred_check_branch
      %27 = sbr.rel (0) target = $region9
    $region8: #{tpu_custom_call.1} parent=1 // pred_region
      %29 = vsyncadd [#allocation6], 0
      %s30 = sshll.u32 %s1, 4
      %s31 = int_to_ptr.hbm [resolvable:$true] %s30
      %s32 = sshll.u32 [#allocation5], 4
      %s33 = int_to_ptr.vmem [resolvable:$true] %s32
      %38 = dma.hbm_to_vmem [thread:$0]  %s31, 256, %s33, [#allocation6], 128, 128, 8
    $region9: #{tpu_custom_call.1} parent=1 // pred_fallthru
      _
    // Predicated region
    $region10: #{tpu_custom_call.1} parent=1 // pred_check
      _
    $region11: #{tpu_custom_call.1} parent=1 // pred_check_branch
      %40 = sbr.rel (0) target = $region13
    $region12: #{tpu_custom_call.1} parent=1 // pred_region
      %42 = vsyncadd [#allocation6], 0
      %s43 = sshll.u32 %s2, 4
      %s44 = int_to_ptr.hbm [resolvable:$true] %s43
      %s45 = sshll.u32 [#allocation7], 4
      %s46 = int_to_ptr.vmem [resolvable:$true] %s45
      %51 = dma.hbm_to_vmem [thread:$0]  %s44, 256, %s46, [#allocation6], 128, 128, 8
    $region13: #{tpu_custom_call.1} parent=1 // pred_fallthru
      _
    // Predicated region
    $region14: #{tpu_custom_call.1} parent=1 // pred_check
      _
    $region15: #{tpu_custom_call.1} parent=1 // pred_check_branch
      %53 = sbr.rel (0) target = $region17
    $region16: #{tpu_custom_call.1} parent=1 // pred_region
      %55 = vsyncadd [#allocation9], 0
      %s56 = sshll.u32 %s3, 4
      %s57 = int_to_ptr.hbm [resolvable:$true] %s56
      %s58 = sshll.u32 [#allocation8], 4
      %s59 = int_to_ptr.vmem [resolvable:$true] %s58
      %64 = dma.hbm_to_vmem [thread:$0]  %s57, 2048, %s59, [#allocation9], 128, 128, 8
    $region17: #{tpu_custom_call.1} parent=1 // pred_fallthru
      _
    // Predicated region
    $region18: #{tpu_custom_call.1} parent=1 // pred_check
      _
    $region19: #{tpu_custom_call.1} parent=1 // pred_check_branch
      %66 = sbr.rel (0) target = $region21
    $region20: #{tpu_custom_call.1} parent=1 // pred_region
      %68 = dma.done [#allocation3], 256
    $region21: #{tpu_custom_call.1} parent=1 // pred_fallthru
      _
    // Predicated region
    $region22: #{tpu_custom_call.1} parent=1 // pred_check
      _
    $region23: #{tpu_custom_call.1} parent=1 // pred_check_branch
      %70 = sbr.rel (0) target = $region25
    $region24: #{tpu_custom_call.1} parent=1 // pred_region
      %72 = dma.done [#allocation6], 256
    $region25: #{tpu_custom_call.1} parent=1 // pred_fallthru
      _
    // Predicated region
    $region26: #{tpu_custom_call.1} parent=1 // pred_check
      _
    $region27: #{tpu_custom_call.1} parent=1 // pred_check_branch
      %74 = sbr.rel (0) target = $region29
    $region28: #{tpu_custom_call.1} parent=1 // pred_region
      %76 = dma.done [#allocation6], 256
    $region29: #{tpu_custom_call.1} parent=1 // pred_fallthru
      _
    // Predicated region
    $region30: #{tpu_custom_call.1} parent=1 // pred_check
      _
    $region31: #{tpu_custom_call.1} parent=1 // pred_check_branch
      %78 = sbr.rel (0) target = $region33
    $region32: #{tpu_custom_call.1} parent=1 // pred_region
      %80 = dma.done [#allocation9], 2048
    $region33: #{tpu_custom_call.1} parent=1 // pred_fallthru
      _
    %v81 = vld [vmem:[#allocation2] sm:$0xff]
    %v82 = vld [vmem:[#allocation2 + $0x8] sm:$0xff]
    %v83 = vld [vmem:[#allocation5] sm:$0xff]
    %v84 = vld [vmem:[#allocation5 + $0x8] sm:$0xff]
    %v85 = vld [vmem:[#allocation7] sm:$0xff]
    %v86 = vld [vmem:[#allocation7 + $0x8] sm:$0xff]
    %v87 = vld [vmem:[#allocation8] sm:$0xff]
    %v88 = vld [vmem:[#allocation8 + $0x8] sm:$0xff]
    %v89 = vld [vmem:[#allocation8 + $0x10] sm:$0xff]
    %v90 = vld [vmem:[#allocation8 + $0x18] sm:$0xff]
    %v91 = vld [vmem:[#allocation8 + $0x20] sm:$0xff]
    %v92 = vld [vmem:[#allocation8 + $0x28] sm:$0xff]
    %v93 = vld [vmem:[#allocation8 + $0x30] sm:$0xff]
    %v94 = vld [vmem:[#allocation8 + $0x38] sm:$0xff]
    %v95 = vld [vmem:[#allocation8 + $0x40] sm:$0xff]
    %v96 = vld [vmem:[#allocation8 + $0x48] sm:$0xff]
    %v97 = vld [vmem:[#allocation8 + $0x50] sm:$0xff]
    %v98 = vld [vmem:[#allocation8 + $0x58] sm:$0xff]
    %v99 = vld [vmem:[#allocation8 + $0x60] sm:$0xff]
    %v100 = vld [vmem:[#allocation8 + $0x68] sm:$0xff]
    %v101 = vld [vmem:[#allocation8 + $0x70] sm:$0xff]
    %v102 = vld [vmem:[#allocation8 + $0x78] sm:$0xff]
    %v103 = vmul.f32 %v81, %v83
    %v104 = vmul.f32 %v82, %v84
    %v105 = vmul.f32 %v81, %v81
    %v106 = vmul.f32 %v82, %v82
    %v107 = vmul.f32 %v83, %v83
    %v108 = vmul.f32 %v84, %v84
    %vm109 = vcmask 130048
    %v111 = vsel %vm109, %v85, 0
    %v114 = vsel %vm109, %v86, 0
    %116 = vmatpush.msra.mxu0 0.0
    %117 = vmatpush.msra.mxu0 0.0
    %118 = vmatpush.msra.mxu0 0.0
    %119 = vmatpush.msra.mxu0 0.0
    %120 = vmatpush.msra.mxu0 0.0
    %121 = vmatpush.msra.mxu0 0.0
    %122 = vmatpush.msra.mxu0 0.0
    %123 = vmatpush.msra.mxu0 0.0
    %124 = vmatpush.msra.mxu0 0.0
    %125 = vmatpush.msra.mxu0 0.0
    %126 = vmatpush.msra.mxu0 0.0
    %127 = vmatpush.msra.mxu0 0.0
    %128 = vmatpush.msra.mxu0 0.0
    %129 = vmatpush.msra.mxu0 0.0
    %130 = vmatpush.msra.mxu0 %v82
    %131 = vmatpush.msra.mxu0 %v81
    %132 = vmatmul.f32.gmra.mxu0 %v111
    %v133 = vpop.f32.mrf.mxu0
    %v134 = vadd.f32 0.0, %v133
    %135 = vmatmul.f32.gmra.mxu0 %v114
    %v136 = vpop.f32.mrf.mxu0
    %v137 = vadd.f32 0.0, %v136
    %138 = vdwg.mxu0
    %139 = vmatpush.msra.mxu0 0.0
    %140 = vmatpush.msra.mxu0 0.0
    %141 = vmatpush.msra.mxu0 0.0
    %142 = vmatpush.msra.mxu0 0.0
    %143 = vmatpush.msra.mxu0 0.0
    %144 = vmatpush.msra.mxu0 0.0
    %145 = vmatpush.msra.mxu0 0.0
    %146 = vmatpush.msra.mxu0 0.0
    %147 = vmatpush.msra.mxu0 0.0
    %148 = vmatpush.msra.mxu0 0.0
    %149 = vmatpush.msra.mxu0 0.0
    %150 = vmatpush.msra.mxu0 0.0
    %151 = vmatpush.msra.mxu0 0.0
    %152 = vmatpush.msra.mxu0 0.0
    %153 = vmatpush.msra.mxu0 %v84
    %154 = vmatpush.msra.mxu0 %v83
    %155 = vmatmul.f32.gmra.mxu0 %v111
    %v156 = vpop.f32.mrf.mxu0
    %v157 = vadd.f32 0.0, %v156
    %158 = vmatmul.f32.gmra.mxu0 %v114
    %v159 = vpop.f32.mrf.mxu0
    %v160 = vadd.f32 0.0, %v159
    %161 = vdwg.mxu0
    %162 = vmatpush.msra.mxu0 0.0
    %163 = vmatpush.msra.mxu0 0.0
    %164 = vmatpush.msra.mxu0 0.0
    %165 = vmatpush.msra.mxu0 0.0
    %166 = vmatpush.msra.mxu0 0.0
    %167 = vmatpush.msra.mxu0 0.0
    %168 = vmatpush.msra.mxu0 0.0
    %169 = vmatpush.msra.mxu0 0.0
    %170 = vmatpush.msra.mxu0 0.0
    %171 = vmatpush.msra.mxu0 0.0
    %172 = vmatpush.msra.mxu0 0.0
    %173 = vmatpush.msra.mxu0 0.0
    %174 = vmatpush.msra.mxu0 0.0
    %175 = vmatpush.msra.mxu0 0.0
    %176 = vmatpush.msra.mxu0 %v104
    %177 = vmatpush.msra.mxu0 %v103
    %178 = vmatmul.f32.gmra.mxu0 %v111
    %v179 = vpop.f32.mrf.mxu0
    %v180 = vadd.f32 0.0, %v179
    %181 = vmatmul.f32.gmra.mxu0 %v114
    %v182 = vpop.f32.mrf.mxu0
    %v183 = vadd.f32 0.0, %v182
    %184 = vdwg.mxu0
    %185 = vmatpush.msra.mxu0 0.0
    %186 = vmatpush.msra.mxu0 0.0
    %187 = vmatpush.msra.mxu0 0.0
    %188 = vmatpush.msra.mxu0 0.0
    %189 = vmatpush.msra.mxu0 0.0
    %190 = vmatpush.msra.mxu0 0.0
    %191 = vmatpush.msra.mxu0 0.0
    %192 = vmatpush.msra.mxu0 0.0
    %193 = vmatpush.msra.mxu0 0.0
    %194 = vmatpush.msra.mxu0 0.0
    %195 = vmatpush.msra.mxu0 0.0
    %196 = vmatpush.msra.mxu0 0.0
    %197 = vmatpush.msra.mxu0 0.0
    %198 = vmatpush.msra.mxu0 0.0
    %199 = vmatpush.msra.mxu0 %v106
    %200 = vmatpush.msra.mxu0 %v105
    %201 = vmatmul.f32.gmra.mxu0 %v111
    %v202 = vpop.f32.mrf.mxu0
    %v203 = vadd.f32 0.0, %v202
    %204 = vmatmul.f32.gmra.mxu0 %v114
    %v205 = vpop.f32.mrf.mxu0
    %v206 = vadd.f32 0.0, %v205
    %207 = vdwg.mxu0
    %208 = vmatpush.msra.mxu0 0.0
    %209 = vmatpush.msra.mxu0 0.0
    %210 = vmatpush.msra.mxu0 0.0
    %211 = vmatpush.msra.mxu0 0.0
    %212 = vmatpush.msra.mxu0 0.0
    %213 = vmatpush.msra.mxu0 0.0
    %214 = vmatpush.msra.mxu0 0.0
    %215 = vmatpush.msra.mxu0 0.0
    %216 = vmatpush.msra.mxu0 0.0
    %217 = vmatpush.msra.mxu0 0.0
    %218 = vmatpush.msra.mxu0 0.0
    %219 = vmatpush.msra.mxu0 0.0
    %220 = vmatpush.msra.mxu0 0.0
    %221 = vmatpush.msra.mxu0 0.0
    %222 = vmatpush.msra.mxu0 %v108
    %223 = vmatpush.msra.mxu0 %v107
    %224 = vmatmul.f32.gmra.mxu0 %v111
    %v225 = vpop.f32.mrf.mxu0
    %v226 = vadd.f32 0.0, %v225
    %227 = vmatmul.f32.gmra.mxu0 %v114
    %v228 = vpop.f32.mrf.mxu0
    %v229 = vadd.f32 0.0, %v228
    %230 = vdwg.mxu0
    %231 = vmatpush.msra.mxu0 %v102
    %232 = vmatpush.msra.mxu0 %v101
    %233 = vmatpush.msra.mxu0 %v100
    %234 = vmatpush.msra.mxu0 %v99
    %235 = vmatpush.msra.mxu0 %v98
    %236 = vmatpush.msra.mxu0 %v97
    %237 = vmatpush.msra.mxu0 %v96
    %238 = vmatpush.msra.mxu0 %v95
    %239 = vmatpush.msra.mxu0 %v94
    %240 = vmatpush.msra.mxu0 %v93
    %241 = vmatpush.msra.mxu0 %v92
    %242 = vmatpush.msra.mxu0 %v91
    %243 = vmatpush.msra.mxu0 %v90
    %244 = vmatpush.msra.mxu0 %v89
    %245 = vmatpush.msra.mxu0 %v88
    %246 = vmatpush.msra.mxu0 %v87
    %247 = vmatmul.f32.gmra.mxu0 %v134
    %v248 = vpop.f32.mrf.mxu0
    %v249 = vadd.f32 0.0, %v248
    %250 = vmatmul.f32.gmra.mxu0 %v137
    %v251 = vpop.f32.mrf.mxu0
    %v252 = vadd.f32 0.0, %v251
    %253 = vdwg.mxu0
    %254 = vmatpush.msra.mxu0 %v102
    %255 = vmatpush.msra.mxu0 %v101
    %256 = vmatpush.msra.mxu0 %v100
    %257 = vmatpush.msra.mxu0 %v99
    %258 = vmatpush.msra.mxu0 %v98
    %259 = vmatpush.msra.mxu0 %v97
    %260 = vmatpush.msra.mxu0 %v96
    %261 = vmatpush.msra.mxu0 %v95
    %262 = vmatpush.msra.mxu0 %v94
    %263 = vmatpush.msra.mxu0 %v93
    %264 = vmatpush.msra.mxu0 %v92
    %265 = vmatpush.msra.mxu0 %v91
    %266 = vmatpush.msra.mxu0 %v90
    %267 = vmatpush.msra.mxu0 %v89
    %268 = vmatpush.msra.mxu0 %v88
    %269 = vmatpush.msra.mxu0 %v87
    %270 = vmatmul.f32.gmra.mxu0 %v157
    %v271 = vpop.f32.mrf.mxu0
    %v272 = vadd.f32 0.0, %v271
    %273 = vmatmul.f32.gmra.mxu0 %v160
    %v274 = vpop.f32.mrf.mxu0
    %v275 = vadd.f32 0.0, %v274
    %276 = vdwg.mxu0
    %v277 = vmul.f32 %v249, %v272
    %v278 = vmul.f32 %v252, %v275
    %279 = vmatpush.msra.mxu0 %v102
    %280 = vmatpush.msra.mxu0 %v101
    %281 = vmatpush.msra.mxu0 %v100
    %282 = vmatpush.msra.mxu0 %v99
    %283 = vmatpush.msra.mxu0 %v98
    %284 = vmatpush.msra.mxu0 %v97
    %285 = vmatpush.msra.mxu0 %v96
    %286 = vmatpush.msra.mxu0 %v95
    %287 = vmatpush.msra.mxu0 %v94
    %288 = vmatpush.msra.mxu0 %v93
    %289 = vmatpush.msra.mxu0 %v92
    %290 = vmatpush.msra.mxu0 %v91
    %291 = vmatpush.msra.mxu0 %v90
    %292 = vmatpush.msra.mxu0 %v89
    %293 = vmatpush.msra.mxu0 %v88
    %294 = vmatpush.msra.mxu0 %v87
    %295 = vmatmul.f32.gmra.mxu0 %v180
    %v296 = vpop.f32.mrf.mxu0
    %v297 = vadd.f32 0.0, %v296
    %298 = vmatmul.f32.gmra.mxu0 %v183
    %v299 = vpop.f32.mrf.mxu0
    %v300 = vadd.f32 0.0, %v299
    %301 = vdwg.mxu0
    %v302 = vsub.f32 %v297, %v277
    %v303 = vsub.f32 %v300, %v278
    %v304 = vmul.f32 %v277, 2.0
    %v305 = vmul.f32 %v278, 2.0
    %v306 = vadd.f32 %v304, 0.0001
    %v307 = vadd.f32 %v305, 0.0001
    %v308 = vmul.f32 %v302, 2.0
    %v309 = vmul.f32 %v303, 2.0
    %v310 = vadd.f32 %v308, 0.0009
    %v311 = vadd.f32 %v309, 0.0009
    %v312 = vmul.f32 %v306, %v310
    %v313 = vmul.f32 %v307, %v311
    %v314 = vmul.f32 %v249, %v249
    %v315 = vmul.f32 %v252, %v252
    %v316 = vmul.f32 %v272, %v272
    %v317 = vmul.f32 %v275, %v275
    %318 = vmatpush.msra.mxu0 %v102
    %319 = vmatpush.msra.mxu0 %v101
    %320 = vmatpush.msra.mxu0 %v100
    %321 = vmatpush.msra.mxu0 %v99
    %322 = vmatpush.msra.mxu0 %v98
    %323 = vmatpush.msra.mxu0 %v97
    %324 = vmatpush.msra.mxu0 %v96
    %325 = vmatpush.msra.mxu0 %v95
    %326 = vmatpush.msra.mxu0 %v94
    %327 = vmatpush.msra.mxu0 %v93
    %328 = vmatpush.msra.mxu0 %v92
    %329 = vmatpush.msra.mxu0 %v91
    %330 = vmatpush.msra.mxu0 %v90
    %331 = vmatpush.msra.mxu0 %v89
    %332 = vmatpush.msra.mxu0 %v88
    %333 = vmatpush.msra.mxu0 %v87
    %334 = vmatmul.f32.gmra.mxu0 %v203
    %v335 = vpop.f32.mrf.mxu0
    %v336 = vadd.f32 0.0, %v335
    %337 = vmatmul.f32.gmra.mxu0 %v206
    %v338 = vpop.f32.mrf.mxu0
    %v339 = vadd.f32 0.0, %v338
    %340 = vdwg.mxu0
    %v341 = vsub.f32 %v336, %v314
    %v342 = vsub.f32 %v339, %v315
    %343 = vmatpush.msra.mxu0 %v102
    %344 = vmatpush.msra.mxu0 %v101
    %345 = vmatpush.msra.mxu0 %v100
    %346 = vmatpush.msra.mxu0 %v99
    %347 = vmatpush.msra.mxu0 %v98
    %348 = vmatpush.msra.mxu0 %v97
    %349 = vmatpush.msra.mxu0 %v96
    %350 = vmatpush.msra.mxu0 %v95
    %351 = vmatpush.msra.mxu0 %v94
    %352 = vmatpush.msra.mxu0 %v93
    %353 = vmatpush.msra.mxu0 %v92
    %354 = vmatpush.msra.mxu0 %v91
    %355 = vmatpush.msra.mxu0 %v90
    %356 = vmatpush.msra.mxu0 %v89
    %357 = vmatpush.msra.mxu0 %v88
    %358 = vmatpush.msra.mxu0 %v87
    %359 = vmatmul.f32.gmra.mxu0 %v226
    %v360 = vpop.f32.mrf.mxu0
    %v361 = vadd.f32 0.0, %v360
    %362 = vmatmul.f32.gmra.mxu0 %v229
    %v363 = vpop.f32.mrf.mxu0
    %v364 = vadd.f32 0.0, %v363
    %365 = vdwg.mxu0
    %v366 = vsub.f32 %v361, %v316
    %v367 = vsub.f32 %v364, %v317
    %v368 = vadd.f32 %v314, %v316
    %v369 = vadd.f32 %v315, %v317
    %v370 = vadd.f32 %v368, 0.0001
    %v371 = vadd.f32 %v369, 0.0001
    %v372 = vadd.f32 %v341, %v366
    %v373 = vadd.f32 %v342, %v367
    %v374 = vadd.f32 %v372, 0.0009
    %v375 = vadd.f32 %v373, 0.0009
    %v376 = vmul.f32 %v370, %v374
    %v377 = vmul.f32 %v371, %v375
    %v378 = vrcp.pop %v376
    %v379 = vmul.f32 %v376, %v378
    %v380 = vsub.f32 1.0, %v379
    %v381 = vmul.f32 %v378, %v380
    %v382 = vadd.f32 %v378, %v381
    %vm383 = vweird.f32 %v376
    %vm384 = vweird.f32 %v378
    %vm385 = vmor %vm383, %vm384
    %v386 = vsel %vm385, %v378, %v382
    %v387 = vand.u32 2147483647, %v376
    %vm388 = vcmp.eq.f32.partialorder %v387, 8.507059e+37
    %v389 = vand.u32 %v376, 2147483648
    %v390 = vor.u32 1.1754944e-38, %v389
    %v391 = vsel %vm388, %v390, %v386
    %v392 = vmul.f32 %v312, %v391
    %v393 = vrcp.pop %v377
    %v394 = vmul.f32 %v377, %v393
    %v395 = vsub.f32 1.0, %v394
    %v396 = vmul.f32 %v393, %v395
    %v397 = vadd.f32 %v393, %v396
    %vm398 = vweird.f32 %v377
    %vm399 = vweird.f32 %v393
    %vm400 = vmor %vm398, %vm399
    %v401 = vsel %vm400, %v393, %v397
    %v402 = vand.u32 2147483647, %v377
    %vm403 = vcmp.eq.f32.partialorder %v402, 8.507059e+37
    %v404 = vand.u32 %v377, 2147483648
    %v405 = vor.u32 1.1754944e-38, %v404
    %v406 = vsel %vm403, %v405, %v401
    %v407 = vmul.f32 %v313, %v406
    %v408 = vadd.f32 %v392, %v407
    %v409 = vrot.slane %v408, 4
    %v410 = vadd.f32 %v408, %v409
    %v411 = vrot.slane %v410, 2
    %v412 = vadd.f32 %v410, %v411
    %v413 = vrot.slane %v412, 1
    %v414 = vadd.f32 %v412, %v413
    %415 = vst [vmem:[#allocation10] sm:$0x1] %v414
    // Predicated region
    $region34: #{tpu_custom_call.1} parent=1 // pred_check
      _
    $region35: #{tpu_custom_call.1} parent=1 // pred_check_branch
      %417 = sbr.rel (0) target = $region37
    $region36: #{tpu_custom_call.1} parent=1 // pred_region
      %419 = vsyncadd [#allocation4], 0
      %s421 = sshll.u32 [#allocation10], 4
      %s422 = int_to_ptr.vmem [resolvable:$true] %s421
      %s423 = sshll.u32 %s4, 4
      %s424 = int_to_ptr.hbm [resolvable:$true] %s423
      %426 = dma.vmem_to_hbm [thread:$0]  %s422, 16, %s424, [#allocation4]
    $region37: #{tpu_custom_call.1} parent=1 // pred_fallthru
      _
    // Predicated region
    $region38: #{tpu_custom_call.1} parent=1 // pred_check
      _
    $region39: #{tpu_custom_call.1} parent=1 // pred_check_branch
      %428 = sbr.rel (0) target = $region41
    $region40: #{tpu_custom_call.1} parent=1 // pred_region
      %430 = dma.done [#allocation4], 16
    $region41: #{tpu_custom_call.1} parent=1 // pred_fallthru
      _
    %431 = vsyncpa [#allocation3], 1
    %432 = vsyncpa [#allocation6], 1
    %433 = vsyncpa [#allocation9], 1
    %434 = vsyncpa [#allocation4], 1

// kernel: tpu_custom_call.1
$region0: #{tpu_custom_call.1}
  #allocation0 [shape = 'u32[]', space=smem, size = 0x4, offset = 0x4, fixed_abs, tag = 'smem constant byte address 0x4 - core index']
  #allocation1 [shape = 'u32[72,128]{1,0:T(1,128)}', space=vmem, size = 0x9000, scoped, tag = 'internal scratch']
  %s0 = inlined_call_operand.hbm [shape: f32[1,16,128], index: 0, kind: input, shape index: {}]
  %s1 = inlined_call_operand.hbm [shape: f32[1,16,128], index: 1, kind: input, shape index: {}]
  %s2 = inlined_call_operand.hbm [shape: f32[16,16], index: 2, kind: input, shape index: {}]
  %s3 = inlined_call_operand.hbm [shape: f32[128,128], index: 3, kind: input, shape index: {}]
  %s4 = inlined_call_operand.hbm [shape: f32[1,1,128], index: 4, kind: output, shape index: {}]
  %s5 = sld [smem:[#allocation0]]
  $region42: #{tpu_custom_call.1} parent=0
    _
  %s7 = ssub.s32 1, %s5
  %s8 = scalar_select 0, %s7, %s5
  $region1: #{tpu_custom_call.1} parent=0
    #allocation2 [shape = 'u8[8192]{0}', space=vmem, size = 0x2000, scoped, tag = 'input window, operand 0, single buffered']
    #allocation3 [shape = 's32[1]{0}', space=sflag, size = 0x4, scoped, tag = 'scoped memory for tpu_custom_call.1']
    #allocation4 [shape = 's32[1]{0}', space=sflag, size = 0x4, scoped, tag = 'scoped memory for tpu_custom_call.1']
    #allocation5 [shape = 'u8[8192]{0}', space=vmem, size = 0x2000, scoped, tag = 'input window, operand 1, single buffered']
    #allocation6 [shape = 's32[1]{0}', space=sflag, size = 0x4, scoped, tag = 'scoped memory for tpu_custom_call.1']
    #allocation7 [shape = 'u8[8192]{0}', space=vmem, size = 0x2000, scoped, tag = 'input window, operand 2, single buffered']
    #allocation8 [shape = 'u8[65536]{0}', space=vmem, size = 0x10000, scoped, tag = 'input window, operand 3, single buffered']
    #allocation9 [shape = 's32[1]{0}', space=sflag, size = 0x4, scoped, tag = 'scoped memory for tpu_custom_call.1']
    #allocation10 [shape = 'u8[512]{0}', space=vmem, size = 0x400, scoped, tag = 'output window, operand 0, single buffered']
    %9 = vsyncpa [#allocation3], 0
    %10 = vsyncpa [#allocation6], 0
    %11 = vsyncpa [#allocation9], 0
    %12 = vsyncpa [#allocation4], 0
    // Predicated region
    $region2: #{tpu_custom_call.1} parent=1 // pred_check
      _
    $region3: #{tpu_custom_call.1} parent=1 // pred_check_branch
      %14 = sbr.rel (0) target = $region5
    $region4: #{tpu_custom_call.1} parent=1 // pred_region
      %16 = vsyncadd [#allocation3], 0
      %s17 = sshll.u32 %s0, 4
      %s18 = int_to_ptr.hbm [resolvable:$true] %s17
      %s19 = sshll.u32 [#allocation2], 4
      %s20 = int_to_ptr.vmem [resolvable:$true] %s19
      %25 = dma.hbm_to_vmem [thread:$0]  %s18, 256, %s20, [#allocation3], 128, 128, 8
    $region5: #{tpu_custom_call.1} parent=1 // pred_fallthru
      _
    // Predicated region
    $region6: #{tpu_custom_call.1} parent=1 // pred_check
      _
    $region7: #{tpu_custom_call.1} parent=1 // pred_check_branch
      %27 = sbr.rel (0) target = $region9
    $region8: #{tpu_custom_call.1} parent=1 // pred_region
      %29 = vsyncadd [#allocation6], 0
      %s30 = sshll.u32 %s1, 4
      %s31 = int_to_ptr.hbm [resolvable:$true] %s30
      %s32 = sshll.u32 [#allocation5], 4
      %s33 = int_to_ptr.vmem [resolvable:$true] %s32
      %38 = dma.hbm_to_vmem [thread:$0]  %s31, 256, %s33, [#allocation6], 128, 128, 8
    $region9: #{tpu_custom_call.1} parent=1 // pred_fallthru
      _
    // Predicated region
    $region10: #{tpu_custom_call.1} parent=1 // pred_check
      _
    $region11: #{tpu_custom_call.1} parent=1 // pred_check_branch
      %40 = sbr.rel (0) target = $region13
    $region12: #{tpu_custom_call.1} parent=1 // pred_region
      %42 = vsyncadd [#allocation6], 0
      %s43 = sshll.u32 %s2, 4
      %s44 = int_to_ptr.hbm [resolvable:$true] %s43
      %s45 = sshll.u32 [#allocation7], 4
      %s46 = int_to_ptr.vmem [resolvable:$true] %s45
      %51 = dma.hbm_to_vmem [thread:$0]  %s44, 256, %s46, [#allocation6], 128, 128, 8
    $region13: #{tpu_custom_call.1} parent=1 // pred_fallthru
      _
    // Predicated region
    $region14: #{tpu_custom_call.1} parent=1 // pred_check
      _
    $region15: #{tpu_custom_call.1} parent=1 // pred_check_branch
      %53 = sbr.rel (0) target = $region17
    $region16: #{tpu_custom_call.1} parent=1 // pred_region
      %55 = vsyncadd [#allocation9], 0
      %s56 = sshll.u32 %s3, 4
      %s57 = int_to_ptr.hbm [resolvable:$true] %s56
      %s58 = sshll.u32 [#allocation8], 4
      %s59 = int_to_ptr.vmem [resolvable:$true] %s58
      %64 = dma.hbm_to_vmem [thread:$0]  %s57, 2048, %s59, [#allocation9], 128, 128, 8
    $region17: #{tpu_custom_call.1} parent=1 // pred_fallthru
      _
    // Predicated region
    $region18: #{tpu_custom_call.1} parent=1 // pred_check
      _
    $region19: #{tpu_custom_call.1} parent=1 // pred_check_branch
      %66 = sbr.rel (0) target = $region21
    $region20: #{tpu_custom_call.1} parent=1 // pred_region
      %68 = dma.done [#allocation3], 256
    $region21: #{tpu_custom_call.1} parent=1 // pred_fallthru
      _
    // Predicated region
    $region22: #{tpu_custom_call.1} parent=1 // pred_check
      _
    $region23: #{tpu_custom_call.1} parent=1 // pred_check_branch
      %70 = sbr.rel (0) target = $region25
    $region24: #{tpu_custom_call.1} parent=1 // pred_region
      %72 = dma.done [#allocation6], 256
    $region25: #{tpu_custom_call.1} parent=1 // pred_fallthru
      _
    // Predicated region
    $region26: #{tpu_custom_call.1} parent=1 // pred_check
      _
    $region27: #{tpu_custom_call.1} parent=1 // pred_check_branch
      %74 = sbr.rel (0) target = $region29
    $region28: #{tpu_custom_call.1} parent=1 // pred_region
      %76 = dma.done [#allocation6], 256
    $region29: #{tpu_custom_call.1} parent=1 // pred_fallthru
      _
    // Predicated region
    $region30: #{tpu_custom_call.1} parent=1 // pred_check
      _
    $region31: #{tpu_custom_call.1} parent=1 // pred_check_branch
      %78 = sbr.rel (0) target = $region33
    $region32: #{tpu_custom_call.1} parent=1 // pred_region
      %80 = dma.done [#allocation9], 2048
    $region33: #{tpu_custom_call.1} parent=1 // pred_fallthru
      _
    %v81 = vld [vmem:[#allocation2] sm:$0xff]
    %v82 = vld [vmem:[#allocation2 + $0x8] sm:$0xff]
    %v83 = vld [vmem:[#allocation5] sm:$0xff]
    %v84 = vld [vmem:[#allocation5 + $0x8] sm:$0xff]
    %v85 = vld [vmem:[#allocation7] sm:$0xff]
    %v86 = vld [vmem:[#allocation7 + $0x8] sm:$0xff]
    %v87 = vld [vmem:[#allocation8] sm:$0xff]
    %v88 = vld [vmem:[#allocation8 + $0x8] sm:$0xff]
    %v89 = vld [vmem:[#allocation8 + $0x10] sm:$0xff]
    %v90 = vld [vmem:[#allocation8 + $0x18] sm:$0xff]
    %v91 = vld [vmem:[#allocation8 + $0x20] sm:$0xff]
    %v92 = vld [vmem:[#allocation8 + $0x28] sm:$0xff]
    %v93 = vld [vmem:[#allocation8 + $0x30] sm:$0xff]
    %v94 = vld [vmem:[#allocation8 + $0x38] sm:$0xff]
    %v95 = vld [vmem:[#allocation8 + $0x40] sm:$0xff]
    %v96 = vld [vmem:[#allocation8 + $0x48] sm:$0xff]
    %v97 = vld [vmem:[#allocation8 + $0x50] sm:$0xff]
    %v98 = vld [vmem:[#allocation8 + $0x58] sm:$0xff]
    %v99 = vld [vmem:[#allocation8 + $0x60] sm:$0xff]
    %v100 = vld [vmem:[#allocation8 + $0x68] sm:$0xff]
    %v101 = vld [vmem:[#allocation8 + $0x70] sm:$0xff]
    %v102 = vld [vmem:[#allocation8 + $0x78] sm:$0xff]
    %v103 = vmul.f32 %v81, %v83
    %v104 = vmul.f32 %v82, %v84
    %v105 = vmul.f32 %v81, %v81
    %v106 = vmul.f32 %v82, %v82
    %v107 = vmul.f32 %v83, %v83
    %v108 = vmul.f32 %v84, %v84
    %vm109 = vcmask 130048
    %v111 = vsel %vm109, %v85, 0
    %v114 = vsel %vm109, %v86, 0
    %116 = vmatpush.msra.mxu0 0.0
    %117 = vmatpush.msra.mxu0 0.0
    %118 = vmatpush.msra.mxu0 0.0
    %119 = vmatpush.msra.mxu0 0.0
    %120 = vmatpush.msra.mxu0 0.0
    %121 = vmatpush.msra.mxu0 0.0
    %122 = vmatpush.msra.mxu0 0.0
    %123 = vmatpush.msra.mxu0 0.0
    %124 = vmatpush.msra.mxu0 0.0
    %125 = vmatpush.msra.mxu0 0.0
    %126 = vmatpush.msra.mxu0 0.0
    %127 = vmatpush.msra.mxu0 0.0
    %128 = vmatpush.msra.mxu0 0.0
    %129 = vmatpush.msra.mxu0 0.0
    %130 = vmatpush.msra.mxu0 %v82
    %131 = vmatpush.msra.mxu0 %v81
    %132 = vmatmul.f32.gmra.mxu0 %v111
    %v133 = vpop.f32.mrf.mxu0
    %v134 = vadd.f32 0.0, %v133
    %135 = vmatmul.f32.gmra.mxu0 %v114
    %v136 = vpop.f32.mrf.mxu0
    %v137 = vadd.f32 0.0, %v136
    %138 = vdwg.mxu0
    %139 = vmatpush.msra.mxu0 0.0
    %140 = vmatpush.msra.mxu0 0.0
    %141 = vmatpush.msra.mxu0 0.0
    %142 = vmatpush.msra.mxu0 0.0
    %143 = vmatpush.msra.mxu0 0.0
    %144 = vmatpush.msra.mxu0 0.0
    %145 = vmatpush.msra.mxu0 0.0
    %146 = vmatpush.msra.mxu0 0.0
    %147 = vmatpush.msra.mxu0 0.0
    %148 = vmatpush.msra.mxu0 0.0
    %149 = vmatpush.msra.mxu0 0.0
    %150 = vmatpush.msra.mxu0 0.0
    %151 = vmatpush.msra.mxu0 0.0
    %152 = vmatpush.msra.mxu0 0.0
    %153 = vmatpush.msra.mxu0 %v84
    %154 = vmatpush.msra.mxu0 %v83
    %155 = vmatmul.f32.gmra.mxu0 %v111
    %v156 = vpop.f32.mrf.mxu0
    %v157 = vadd.f32 0.0, %v156
    %158 = vmatmul.f32.gmra.mxu0 %v114
    %v159 = vpop.f32.mrf.mxu0
    %v160 = vadd.f32 0.0, %v159
    %161 = vdwg.mxu0
    %162 = vmatpush.msra.mxu0 0.0
    %163 = vmatpush.msra.mxu0 0.0
    %164 = vmatpush.msra.mxu0 0.0
    %165 = vmatpush.msra.mxu0 0.0
    %166 = vmatpush.msra.mxu0 0.0
    %167 = vmatpush.msra.mxu0 0.0
    %168 = vmatpush.msra.mxu0 0.0
    %169 = vmatpush.msra.mxu0 0.0
    %170 = vmatpush.msra.mxu0 0.0
    %171 = vmatpush.msra.mxu0 0.0
    %172 = vmatpush.msra.mxu0 0.0
    %173 = vmatpush.msra.mxu0 0.0
    %174 = vmatpush.msra.mxu0 0.0
    %175 = vmatpush.msra.mxu0 0.0
    %176 = vmatpush.msra.mxu0 %v104
    %177 = vmatpush.msra.mxu0 %v103
    %178 = vmatmul.f32.gmra.mxu0 %v111
    %v179 = vpop.f32.mrf.mxu0
    %v180 = vadd.f32 0.0, %v179
    %181 = vmatmul.f32.gmra.mxu0 %v114
    %v182 = vpop.f32.mrf.mxu0
    %v183 = vadd.f32 0.0, %v182
    %184 = vdwg.mxu0
    %185 = vmatpush.msra.mxu0 0.0
    %186 = vmatpush.msra.mxu0 0.0
    %187 = vmatpush.msra.mxu0 0.0
    %188 = vmatpush.msra.mxu0 0.0
    %189 = vmatpush.msra.mxu0 0.0
    %190 = vmatpush.msra.mxu0 0.0
    %191 = vmatpush.msra.mxu0 0.0
    %192 = vmatpush.msra.mxu0 0.0
    %193 = vmatpush.msra.mxu0 0.0
    %194 = vmatpush.msra.mxu0 0.0
    %195 = vmatpush.msra.mxu0 0.0
    %196 = vmatpush.msra.mxu0 0.0
    %197 = vmatpush.msra.mxu0 0.0
    %198 = vmatpush.msra.mxu0 0.0
    %199 = vmatpush.msra.mxu0 %v106
    %200 = vmatpush.msra.mxu0 %v105
    %201 = vmatmul.f32.gmra.mxu0 %v111
    %v202 = vpop.f32.mrf.mxu0
    %v203 = vadd.f32 0.0, %v202
    %204 = vmatmul.f32.gmra.mxu0 %v114
    %v205 = vpop.f32.mrf.mxu0
    %v206 = vadd.f32 0.0, %v205
    %207 = vdwg.mxu0
    %208 = vmatpush.msra.mxu0 0.0
    %209 = vmatpush.msra.mxu0 0.0
    %210 = vmatpush.msra.mxu0 0.0
    %211 = vmatpush.msra.mxu0 0.0
    %212 = vmatpush.msra.mxu0 0.0
    %213 = vmatpush.msra.mxu0 0.0
    %214 = vmatpush.msra.mxu0 0.0
    %215 = vmatpush.msra.mxu0 0.0
    %216 = vmatpush.msra.mxu0 0.0
    %217 = vmatpush.msra.mxu0 0.0
    %218 = vmatpush.msra.mxu0 0.0
    %219 = vmatpush.msra.mxu0 0.0
    %220 = vmatpush.msra.mxu0 0.0
    %221 = vmatpush.msra.mxu0 0.0
    %222 = vmatpush.msra.mxu0 %v108
    %223 = vmatpush.msra.mxu0 %v107
    %224 = vmatmul.f32.gmra.mxu0 %v111
    %v225 = vpop.f32.mrf.mxu0
    %v226 = vadd.f32 0.0, %v225
    %227 = vmatmul.f32.gmra.mxu0 %v114
    %v228 = vpop.f32.mrf.mxu0
    %v229 = vadd.f32 0.0, %v228
    %230 = vdwg.mxu0
    %231 = vmatpush.msra.mxu0 %v102
    %232 = vmatpush.msra.mxu0 %v101
    %233 = vmatpush.msra.mxu0 %v100
    %234 = vmatpush.msra.mxu0 %v99
    %235 = vmatpush.msra.mxu0 %v98
    %236 = vmatpush.msra.mxu0 %v97
    %237 = vmatpush.msra.mxu0 %v96
    %238 = vmatpush.msra.mxu0 %v95
    %239 = vmatpush.msra.mxu0 %v94
    %240 = vmatpush.msra.mxu0 %v93
    %241 = vmatpush.msra.mxu0 %v92
    %242 = vmatpush.msra.mxu0 %v91
    %243 = vmatpush.msra.mxu0 %v90
    %244 = vmatpush.msra.mxu0 %v89
    %245 = vmatpush.msra.mxu0 %v88
    %246 = vmatpush.msra.mxu0 %v87
    %247 = vmatmul.f32.gmra.mxu0 %v134
    %v248 = vpop.f32.mrf.mxu0
    %v249 = vadd.f32 0.0, %v248
    %250 = vmatmul.f32.gmra.mxu0 %v137
    %v251 = vpop.f32.mrf.mxu0
    %v252 = vadd.f32 0.0, %v251
    %253 = vdwg.mxu0
    %254 = vmatpush.msra.mxu0 %v102
    %255 = vmatpush.msra.mxu0 %v101
    %256 = vmatpush.msra.mxu0 %v100
    %257 = vmatpush.msra.mxu0 %v99
    %258 = vmatpush.msra.mxu0 %v98
    %259 = vmatpush.msra.mxu0 %v97
    %260 = vmatpush.msra.mxu0 %v96
    %261 = vmatpush.msra.mxu0 %v95
    %262 = vmatpush.msra.mxu0 %v94
    %263 = vmatpush.msra.mxu0 %v93
    %264 = vmatpush.msra.mxu0 %v92
    %265 = vmatpush.msra.mxu0 %v91
    %266 = vmatpush.msra.mxu0 %v90
    %267 = vmatpush.msra.mxu0 %v89
    %268 = vmatpush.msra.mxu0 %v88
    %269 = vmatpush.msra.mxu0 %v87
    %270 = vmatmul.f32.gmra.mxu0 %v157
    %v271 = vpop.f32.mrf.mxu0
    %v272 = vadd.f32 0.0, %v271
    %273 = vmatmul.f32.gmra.mxu0 %v160
    %v274 = vpop.f32.mrf.mxu0
    %v275 = vadd.f32 0.0, %v274
    %276 = vdwg.mxu0
    %v277 = vmul.f32 %v249, %v272
    %v278 = vmul.f32 %v252, %v275
    %279 = vmatpush.msra.mxu0 %v102
    %280 = vmatpush.msra.mxu0 %v101
    %281 = vmatpush.msra.mxu0 %v100
    %282 = vmatpush.msra.mxu0 %v99
    %283 = vmatpush.msra.mxu0 %v98
    %284 = vmatpush.msra.mxu0 %v97
    %285 = vmatpush.msra.mxu0 %v96
    %286 = vmatpush.msra.mxu0 %v95
    %287 = vmatpush.msra.mxu0 %v94
    %288 = vmatpush.msra.mxu0 %v93
    %289 = vmatpush.msra.mxu0 %v92
    %290 = vmatpush.msra.mxu0 %v91
    %291 = vmatpush.msra.mxu0 %v90
    %292 = vmatpush.msra.mxu0 %v89
    %293 = vmatpush.msra.mxu0 %v88
    %294 = vmatpush.msra.mxu0 %v87
    %295 = vmatmul.f32.gmra.mxu0 %v180
    %v296 = vpop.f32.mrf.mxu0
    %v297 = vadd.f32 0.0, %v296
    %298 = vmatmul.f32.gmra.mxu0 %v183
    %v299 = vpop.f32.mrf.mxu0
    %v300 = vadd.f32 0.0, %v299
    %301 = vdwg.mxu0
    %v302 = vsub.f32 %v297, %v277
    %v303 = vsub.f32 %v300, %v278
    %v304 = vmul.f32 %v277, 2.0
    %v305 = vmul.f32 %v278, 2.0
    %v306 = vadd.f32 %v304, 0.0001
    %v307 = vadd.f32 %v305, 0.0001
    %v308 = vmul.f32 %v302, 2.0
    %v309 = vmul.f32 %v303, 2.0
    %v310 = vadd.f32 %v308, 0.0009
    %v311 = vadd.f32 %v309, 0.0009
    %v312 = vmul.f32 %v306, %v310
    %v313 = vmul.f32 %v307, %v311
    %v314 = vmul.f32 %v249, %v249
    %v315 = vmul.f32 %v252, %v252
    %v316 = vmul.f32 %v272, %v272
    %v317 = vmul.f32 %v275, %v275
    %318 = vmatpush.msra.mxu0 %v102
    %319 = vmatpush.msra.mxu0 %v101
    %320 = vmatpush.msra.mxu0 %v100
    %321 = vmatpush.msra.mxu0 %v99
    %322 = vmatpush.msra.mxu0 %v98
    %323 = vmatpush.msra.mxu0 %v97
    %324 = vmatpush.msra.mxu0 %v96
    %325 = vmatpush.msra.mxu0 %v95
    %326 = vmatpush.msra.mxu0 %v94
    %327 = vmatpush.msra.mxu0 %v93
    %328 = vmatpush.msra.mxu0 %v92
    %329 = vmatpush.msra.mxu0 %v91
    %330 = vmatpush.msra.mxu0 %v90
    %331 = vmatpush.msra.mxu0 %v89
    %332 = vmatpush.msra.mxu0 %v88
    %333 = vmatpush.msra.mxu0 %v87
    %334 = vmatmul.f32.gmra.mxu0 %v203
    %v335 = vpop.f32.mrf.mxu0
    %v336 = vadd.f32 0.0, %v335
    %337 = vmatmul.f32.gmra.mxu0 %v206
    %v338 = vpop.f32.mrf.mxu0
    %v339 = vadd.f32 0.0, %v338
    %340 = vdwg.mxu0
    %v341 = vsub.f32 %v336, %v314
    %v342 = vsub.f32 %v339, %v315
    %343 = vmatpush.msra.mxu0 %v102
    %344 = vmatpush.msra.mxu0 %v101
    %345 = vmatpush.msra.mxu0 %v100
    %346 = vmatpush.msra.mxu0 %v99
    %347 = vmatpush.msra.mxu0 %v98
    %348 = vmatpush.msra.mxu0 %v97
    %349 = vmatpush.msra.mxu0 %v96
    %350 = vmatpush.msra.mxu0 %v95
    %351 = vmatpush.msra.mxu0 %v94
    %352 = vmatpush.msra.mxu0 %v93
    %353 = vmatpush.msra.mxu0 %v92
    %354 = vmatpush.msra.mxu0 %v91
    %355 = vmatpush.msra.mxu0 %v90
    %356 = vmatpush.msra.mxu0 %v89
    %357 = vmatpush.msra.mxu0 %v88
    %358 = vmatpush.msra.mxu0 %v87
    %359 = vmatmul.f32.gmra.mxu0 %v226
    %v360 = vpop.f32.mrf.mxu0
    %v361 = vadd.f32 0.0, %v360
    %362 = vmatmul.f32.gmra.mxu0 %v229
    %v363 = vpop.f32.mrf.mxu0
    %v364 = vadd.f32 0.0, %v363
    %365 = vdwg.mxu0
    %v366 = vsub.f32 %v361, %v316
    %v367 = vsub.f32 %v364, %v317
    %v368 = vadd.f32 %v314, %v316
    %v369 = vadd.f32 %v315, %v317
    %v370 = vadd.f32 %v368, 0.0001
    %v371 = vadd.f32 %v369, 0.0001
    %v372 = vadd.f32 %v341, %v366
    %v373 = vadd.f32 %v342, %v367
    %v374 = vadd.f32 %v372, 0.0009
    %v375 = vadd.f32 %v373, 0.0009
    %v376 = vmul.f32 %v370, %v374
    %v377 = vmul.f32 %v371, %v375
    %v378 = vrcp.pop %v376
    %v379 = vmul.f32 %v376, %v378
    %v380 = vsub.f32 1.0, %v379
    %v381 = vmul.f32 %v378, %v380
    %v382 = vadd.f32 %v378, %v381
    %vm383 = vweird.f32 %v376
    %vm384 = vweird.f32 %v378
    %vm385 = vmor %vm383, %vm384
    %v386 = vsel %vm385, %v378, %v382
    %v387 = vand.u32 2147483647, %v376
    %vm388 = vcmp.eq.f32.partialorder %v387, 8.507059e+37
    %v389 = vand.u32 %v376, 2147483648
    %v390 = vor.u32 1.1754944e-38, %v389
    %v391 = vsel %vm388, %v390, %v386
    %v392 = vmul.f32 %v312, %v391
    %v393 = vrcp.pop %v377
    %v394 = vmul.f32 %v377, %v393
    %v395 = vsub.f32 1.0, %v394
    %v396 = vmul.f32 %v393, %v395
    %v397 = vadd.f32 %v393, %v396
    %vm398 = vweird.f32 %v377
    %vm399 = vweird.f32 %v393
    %vm400 = vmor %vm398, %vm399
    %v401 = vsel %vm400, %v393, %v397
    %v402 = vand.u32 2147483647, %v377
    %vm403 = vcmp.eq.f32.partialorder %v402, 8.507059e+37
    %v404 = vand.u32 %v377, 2147483648
    %v405 = vor.u32 1.1754944e-38, %v404
    %v406 = vsel %vm403, %v405, %v401
    %v407 = vmul.f32 %v313, %v406
    %v408 = vadd.f32 %v392, %v407
    %v409 = vrot.slane %v408, 4
    %v410 = vadd.f32 %v408, %v409
    %v411 = vrot.slane %v410, 2
    %v412 = vadd.f32 %v410, %v411
    %v413 = vrot.slane %v412, 1
    %v414 = vadd.f32 %v412, %v413
    %415 = vst [vmem:[#allocation10] sm:$0x1] %v414
    // Predicated region
    $region34: #{tpu_custom_call.1} parent=1 // pred_check
      _
    $region35: #{tpu_custom_call.1} parent=1 // pred_check_branch
      %417 = sbr.rel (0) target = $region37
    $region36: #{tpu_custom_call.1} parent=1 // pred_region
      %419 = vsyncadd [#allocation4], 0
      %s421 = sshll.u32 [#allocation10], 4
      %s422 = int_to_ptr.vmem [resolvable:$true] %s421
      %s423 = sshll.u32 %s4, 4
      %s424 = int_to_ptr.hbm [resolvable:$true] %s423
      %426 = dma.vmem_to_hbm [thread:$0]  %s422, 16, %s424, [#allocation4]
    $region37: #{tpu_custom_call.1} parent=1 // pred_fallthru
      _
    // Predicated region
    $region38: #{tpu_custom_call.1} parent=1 // pred_check
      _
    $region39: #{tpu_custom_call.1} parent=1 // pred_check_branch
      %428 = sbr.rel (0) target = $region41
    $region40: #{tpu_custom_call.1} parent=1 // pred_region
      %430 = dma.done [#allocation4], 16
    $region41: #{tpu_custom_call.1} parent=1 // pred_fallthru
      _
    %431 = vsyncpa [#allocation3], 1
    %432 = vsyncpa [#allocation6], 1
    %433 = vsyncpa [#allocation9], 1
    %434 = vsyncpa [#allocation4], 1

</llo_original>
